<compile_context>
chip_gen: v5e
topology: v5e:2x2
jax: 0.10.0
libtpu: 0.0.40
codegen_flags: <defaults>
</compile_context>

<pallas_src>
import jax
import jax.numpy as jnp
from jax import lax
from jax.experimental import pallas as pl
from jax.experimental.pallas import tpu as pltpu


def _round_up(x, m):
    return ((x + m - 1) // m) * m


# ----------------------------- Pallas kernel -------------------------------
def _patch_proj_kernel(x_ref, w_ref, b_ref, o_ref, acc_ref):
    # x_ref: (TM, TK) bf16, w_ref: (TK, N) bf16, b_ref: (1, N) f32,
    # o_ref: (TM, N) f32, acc_ref: (TM, N) f32 scratch (lives across K steps).
    k = pl.program_id(1)

    @pl.when(k == 0)
    def _():
        acc_ref[...] = jnp.zeros_like(acc_ref)

    acc_ref[...] += jnp.dot(x_ref[...], w_ref[...],
                            preferred_element_type=jnp.float32)

    @pl.when(k == pl.num_programs(1) - 1)
    def _():
        # Bias added only in the finalize step (hoisted out of the K loop).
        o_ref[...] = (acc_ref[...] + b_ref[...]).astype(o_ref.dtype)


def _patch_projection(patches, w_mat, b_row, *, tile_m=512, tile_k=512):
    """patches: (M, K), w_mat: (K, N), b_row: (1, N) -> (M, N) f32.

    N must already be a multiple of 128 (lane-dense output). M and K are
    padded here as needed so blocks satisfy the (8, 128) tiling rules.
    """
    M, K = patches.shape
    Kw, N = w_mat.shape
    assert Kw == K
    assert N % 128 == 0, "pad out_channels to a multiple of 128 before calling"

    # M tile: multiple of 8, at most tile_m.
    TM = min(tile_m, _round_up(M, 8))
    M_pad = _round_up(M, TM)

    # K tile: full K when small (block == full dim is exempt from the 128
    # rule); otherwise a 128-aligned tile with a reduction grid axis.
    if K <= tile_k:
        TK, K_pad = K, K
    else:
        TK = tile_k
        K_pad = _round_up(K, TK)

    if M_pad != M or K_pad != K:
        patches = jnp.pad(patches, ((0, M_pad - M), (0, K_pad - K)))
    if K_pad != K:
        w_mat = jnp.pad(w_mat, ((0, K_pad - K), (0, 0)))

    grid = (M_pad // TM, K_pad // TK)

    cost = pl.CostEstimate(
        flops=2 * M_pad * K_pad * N,
        transcendentals=0,
        bytes_accessed=(M_pad * K_pad * patches.dtype.itemsize
                        + K_pad * N * w_mat.dtype.itemsize
                        + M_pad * N * 4))

    out = pl.pallas_call(
        _patch_proj_kernel,
        out_shape=jax.ShapeDtypeStruct((M_pad, N), jnp.float32),
        grid_spec=pltpu.PrefetchScalarGridSpec(
            num_scalar_prefetch=0,
            grid=grid,
            in_specs=[
                pl.BlockSpec((TM, TK), lambda i, k: (i, k)),
                pl.BlockSpec((TK, N), lambda i, k: (k, 0)),   # weight stays VMEM-resident over M
                pl.BlockSpec((1, N), lambda i, k: (0, 0)),    # bias resident
            ],
            out_specs=pl.BlockSpec((TM, N), lambda i, k: (i, 0)),
            scratch_shapes=[pltpu.VMEM((TM, N), jnp.float32)],
        ),
        compiler_params=pltpu.CompilerParams(
            dimension_semantics=("parallel", "arbitrary")),
        cost_estimate=cost,
    )(patches, w_mat, b_row)
    return out[:M]


# ------------------------------ Module wrapper ------------------------------
class ImageToPatch3D:
    """JAX/Pallas re-implementation of the PyTorch ImageToPatch3D module."""

    def __init__(self, img_dims, patch_dims, in_channels, out_channels, key,
                 compute_dtype=jnp.bfloat16, tile_m=512):
        self.img_dims = tuple(img_dims)
        self.patch_dims = tuple(patch_dims)
        self.in_channels = in_channels
        self.out_channels = out_channels
        self.compute_dtype = compute_dtype
        self.tile_m = tile_m

        depth, height, width = img_dims
        pd, ph, pw = patch_dims

        def _pad_amounts(size, p):
            mod = size % p
            if mod:
                pad = p - mod
                return pad // 2, pad - pad // 2
            return 0, 0

        self.pad_d = _pad_amounts(depth, pd)   # (front, back)
        self.pad_h = _pad_amounts(height, ph)  # (top, bottom)
        self.pad_w = _pad_amounts(width, pw)   # (left, right)

        # Deterministic parameter init (matches Conv3d parameter shapes).
        k_w, k_b = jax.random.split(key)
        K = in_channels * pd * ph * pw
        bound = 1.0 / (K ** 0.5)
        # weight: (out_channels, in_channels, pd, ph, pw), bias: (out_channels,)
        self.weight = jax.random.uniform(
            k_w, (out_channels, in_channels, pd, ph, pw),
            minval=-bound, maxval=bound, dtype=jnp.float32)
        self.bias = jax.random.uniform(
            k_b, (out_channels,), minval=-bound, maxval=bound, dtype=jnp.float32)

        # Precompute the projection matrix / bias row once, padded to a
        # lane-dense N (multiple of 128) so kernel stores are unmasked.
        n_pad = _round_up(out_channels, 128)
        w_mat = self.weight.reshape(out_channels, K).T          # (K, N)
        if n_pad != out_channels:
            w_mat = jnp.pad(w_mat, ((0, 0), (0, n_pad - out_channels)))
            b_row = jnp.pad(self.bias, (0, n_pad - out_channels))
        else:
            b_row = self.bias
        self._w_mat = w_mat.astype(compute_dtype)               # (K, n_pad) bf16
        self._b_row = b_row.reshape(1, n_pad).astype(jnp.float32)
        self._n_pad = n_pad

        # TODO(synk): normalization_layer is None in this synthetic setup; a
        # LayerNorm variant would be a small extra elementwise Pallas kernel.
        self.normalization = None

    def __call__(self, x):
        # x: (B, C, D, H, W)  -- NCDHW, same as PyTorch.
        B, C, D, H, W = x.shape
        assert (D, H, W) == self.img_dims, (
            f"input size ({D}x{H}x{W}) != expected {self.img_dims}")
        pd, ph, pw = self.patch_dims

        # Zero padding (nn.ZeroPad3d semantics).
        x = jnp.pad(
            x,
            ((0, 0), (0, 0), self.pad_d, self.pad_h, self.pad_w),
            mode="constant", constant_values=0.0)
        _, _, Dp, Hp, Wp = x.shape
        nD, nH, nW = Dp // pd, Hp // ph, Wp // pw

        # Cast to bf16 *before* the patch shuffle: halves HBM traffic of the
        # transpose, which dominates bytes outside the kernel.
        x = x.astype(self.compute_dtype)

        # Extract non-overlapping patches -> (B*nD*nH*nW, C*pd*ph*pw).
        # TODO(synk): fully fusing this gather into the kernel (manual DMA of
        # (C,pd,ph,pw) slabs into a VMEM staging buffer) would remove the
        # remaining host-side HBM round-trip; kept as plain-JAX glue here.
        x = x.reshape(B, C, nD, pd, nH, ph, nW, pw)
        x = x.transpose(0, 2, 4, 6, 1, 3, 5, 7)          # (B, nD, nH, nW, C, pd, ph, pw)
        patches = x.reshape(B * nD * nH * nW, C * pd * ph * pw)

        # Conv3d with kernel==stride == per-patch matmul (Pallas kernel).
        out = _patch_projection(patches, self._w_mat, self._b_row,
                                tile_m=self.tile_m)       # (M, n_pad) f32

        # Drop lane padding, back to (B, out_channels, nD, nH, nW).
        out = out[:, :self.out_channels]
        out = out.reshape(B, nD, nH, nW, self.out_channels)
        out = out.transpose(0, 4, 1, 2, 3)
        return out


# ------------------------------ Reference check ------------------------------
def _reference_forward(module, x):
    """Pure-JAX reference (lax conv).  Inputs/weights are quantized to the
    kernel's compute dtype so the comparison isolates the kernel math."""
    xq = x.astype(module.compute_dtype).astype(jnp.float32)
    wq = module.weight.astype(module.compute_dtype).astype(jnp.float32)
    xq = jnp.pad(
        xq,
        ((0, 0), (0, 0), module.pad_d, module.pad_h, module.pad_w),
        mode="constant", constant_values=0.0)
    out = lax.conv_general_dilated(
        xq, wq,
        window_strides=module.patch_dims,
        padding="VALID",
        dimension_numbers=("NCDHW", "OIDHW", "NCDHW"),
        precision=lax.Precision.HIGHEST)
    return out + module.bias.reshape(1, -1, 1, 1, 1)


if __name__ == "__main__":
    key = jax.random.PRNGKey(0)
    k_param, k_x = jax.random.split(key)

    # Small shapes: depth=6 exercises the padding branch (6 % 4 != 0).
    img_dims = (6, 16, 16)
    patch_dims = (4, 4, 4)
    in_channels = 4
    out_channels = 32     # padded to 128 lanes inside the module
    batch = 2

    module = ImageToPatch3D(img_dims, patch_dims, in_channels, out_channels, k_param)

    x = jax.random.normal(k_x, (batch, in_channels) + img_dims, dtype=jnp.float32)

    out = jax.block_until_ready(module(x))
    ref = jax.block_until_ready(_reference_forward(module, x))

    assert out.shape == ref.shape == (batch, out_channels, 2, 4, 4), out.shape
    max_err = float(jnp.max(jnp.abs(out - ref)))
    assert jnp.allclose(out, ref, atol=1e-3, rtol=1e-3), max_err

    print("KERNEL_OK")
</pallas_src>

<mosaic_0001>
module attributes {stable_mosaic.version = 11 : i64} {
  func.func @_patch_proj_kernel(%arg0: i32, %arg1: i32, %arg2: memref<64x256xbf16, #tpu.memory_space<vmem>>, %arg3: memref<256x128xbf16, #tpu.memory_space<vmem>>, %arg4: memref<1x128xf32, #tpu.memory_space<vmem>>, %arg5: memref<64x128xf32, #tpu.memory_space<vmem>>, %arg6: memref<64x128xf32, #tpu.memory_space<vmem>>) attributes {dimension_semantics = [#tpu.dimension_semantics<parallel>, #tpu.dimension_semantics<arbitrary>], iteration_bounds = array<i64: 1, 1>, scalar_prefetch = 0 : i64, scratch_operands = 1 : i64, tpu.core_type = #tpu.core_type<tc>, window_params = [{transform_indices = @transform_0, window_bounds = array<i64: 64, 256>}, {transform_indices = @transform_1, window_bounds = array<i64: 256, 128>}, {pipeline_mode = #tpu.pipeline_mode<synchronous>, transform_indices = @transform_2, window_bounds = array<i64: 1, 128>}, {transform_indices = @transform_3, window_bounds = array<i64: 64, 128>}]} {
    %c0_i32 = arith.constant 0 : i32
    %0 = arith.cmpi eq, %arg1, %c0_i32 : i32
    %1 = arith.extui %0 : i1 to i32
    %c0_i32_0 = arith.constant 0 : i32
    %2 = arith.cmpi ne, %1, %c0_i32_0 : i32
    scf.if %2 {
      %cst_10 = arith.constant 0.000000e+00 : f32
      %12 = vector.broadcast %cst_10 : f32 to vector<64x128xf32>
      %c0_11 = arith.constant 0 : index
      %c0_12 = arith.constant 0 : index
      %13 = vector.load %arg6[%c0_11, %c0_12] : memref<64x128xf32, #tpu.memory_space<vmem>>, vector<64x128xf32>
      tpu.vector_store %arg6[%c0_11, %c0_12], %12 {strides = array<i32>} : memref<64x128xf32, #tpu.memory_space<vmem>>, vector<64x128xf32>,
    } else {
    }
    %c0 = arith.constant 0 : index
    %c0_1 = arith.constant 0 : index
    %3 = vector.load %arg6[%c0, %c0_1] : memref<64x128xf32, #tpu.memory_space<vmem>>, vector<64x128xf32>
    %c0_2 = arith.constant 0 : index
    %c0_3 = arith.constant 0 : index
    %4 = vector.load %arg2[%c0_2, %c0_3] : memref<64x256xbf16, #tpu.memory_space<vmem>>, vector<64x256xbf16>
    %c0_4 = arith.constant 0 : index
    %c0_5 = arith.constant 0 : index
    %5 = vector.load %arg3[%c0_4, %c0_5] : memref<256x128xbf16, #tpu.memory_space<vmem>>, vector<256x128xbf16>
    %cst = arith.constant dense<0.000000e+00> : vector<64x128xf32>
    %6 = tpu.matmul %4, %5, %cst {dimension_numbers = #tpu.dot_dimension_numbers<[1], [0], [0], [1], [0, 0, 1, 1], [], []>} : vector<64x256xbf16>, vector<256x128xbf16>, vector<64x128xf32> -> vector<64x128xf32>
    %7 = arith.addf %3, %6 : vector<64x128xf32>
    %c0_6 = arith.constant 0 : index
    %c0_7 = arith.constant 0 : index
    %8 = vector.load %arg6[%c0_6, %c0_7] : memref<64x128xf32, #tpu.memory_space<vmem>>, vector<64x128xf32>
    tpu.vector_store %arg6[%c0_6, %c0_7], %7 {strides = array<i32>} : memref<64x128xf32, #tpu.memory_space<vmem>>, vector<64x128xf32>,
    %c0_i32_8 = arith.constant 0 : i32
    %9 = arith.cmpi eq, %arg1, %c0_i32_8 : i32
    %10 = arith.extui %9 : i1 to i32
    %c0_i32_9 = arith.constant 0 : i32
    %11 = arith.cmpi ne, %10, %c0_i32_9 : i32
    scf.if %11 {
      %c0_10 = arith.constant 0 : index
      %c0_11 = arith.constant 0 : index
      %12 = vector.load %arg6[%c0_10, %c0_11] : memref<64x128xf32, #tpu.memory_space<vmem>>, vector<64x128xf32>
      %c0_12 = arith.constant 0 : index
      %c0_13 = arith.constant 0 : index
      %13 = vector.load %arg4[%c0_12, %c0_13] : memref<1x128xf32, #tpu.memory_space<vmem>>, vector<1x128xf32>
      %14 = vector.broadcast %13 : vector<1x128xf32> to vector<64x128xf32>
      %15 = arith.addf %12, %14 : vector<64x128xf32>
      %c0_14 = arith.constant 0 : index
      %c0_15 = arith.constant 0 : index
      %16 = vector.load %arg5[%c0_14, %c0_15] : memref<64x128xf32, #tpu.memory_space<vmem>>, vector<64x128xf32>
      tpu.vector_store %arg5[%c0_14, %c0_15], %15 {strides = array<i32>} : memref<64x128xf32, #tpu.memory_space<vmem>>, vector<64x128xf32>,
    } else {
    }
    return
  }
  func.func @transform_0(%arg0: i32, %arg1: i32) -> (i32, i32) {
    %c0_i32 = arith.constant 0 : i32
    return %arg0, %arg1 : i32, i32
  }
  func.func @transform_1(%arg0: i32, %arg1: i32) -> (i32, i32) {
    %c0_i32 = arith.constant 0 : i32
    %c0_i32_0 = arith.constant 0 : i32
    return %arg1, %c0_i32 : i32, i32
  }
  func.func @transform_2(%arg0: i32, %arg1: i32) -> (i32, i32) {
    %c0_i32 = arith.constant 0 : i32
    %c0_i32_0 = arith.constant 0 : i32
    %c0_i32_1 = arith.constant 0 : i32
    return %c0_i32, %c0_i32_0 : i32, i32
  }
  func.func @transform_3(%arg0: i32, %arg1: i32) -> (i32, i32) {
    %c0_i32 = arith.constant 0 : i32
    %c0_i32_0 = arith.constant 0 : i32
    return %arg0, %c0_i32 : i32, i32
  }
}

</mosaic_0001>

<llo_original>
// kernel: tpu_custom_call.1
$region0: #{tpu_custom_call.1}
  #allocation0 [shape = 'u32[]', space=smem, size = 0x4, offset = 0x4, fixed_abs, tag = 'smem constant byte address 0x4 - core index']
  #allocation1 [shape = 'u32[72,128]{1,0:T(1,128)}', space=vmem, size = 0x9000, scoped, tag = 'internal scratch']
  #allocation2 [shape = 'f32[64,128]{1,0:T(8,128)}', space=vmem, size = 0x8000, scoped, tag = 'scratch operand']
  %s0 = inlined_call_operand.hbm [shape: bf16[64,256], index: 0, kind: input, shape index: {}]
  %s1 = inlined_call_operand.hbm [shape: bf16[256,128], index: 1, kind: input, shape index: {}]
  %s2 = inlined_call_operand.vmem [shape: f32[1,128], index: 2, kind: input, shape index: {}]
  %s3 = inlined_call_operand.hbm [shape: f32[64,128], index: 3, kind: output, shape index: {}]
  %s4 = sld [smem:[#allocation0]]
  $region38: #{tpu_custom_call.1} parent=0
    _
  %s6 = ssub.s32 1, %s4
  %s7 = scalar_select 0, %s6, %s4
  $region1: #{tpu_custom_call.1} parent=0
    #allocation3 [shape = 'u8[32768]{0}', space=vmem, size = 0x8000, scoped, tag = 'input window, operand 0, single buffered']
    #allocation4 [shape = 's32[1]{0}', space=sflag, size = 0x4, scoped, tag = 'scoped memory for tpu_custom_call.1']
    #allocation5 [shape = 's32[1]{0}', space=sflag, size = 0x4, scoped, tag = 'scoped memory for tpu_custom_call.1']
    #allocation6 [shape = 'u8[65536]{0}', space=vmem, size = 0x10000, scoped, tag = 'input window, operand 1, single buffered']
    #allocation7 [shape = 's32[1]{0}', space=sflag, size = 0x4, scoped, tag = 'scoped memory for tpu_custom_call.1']
    #allocation8 [shape = 'u8[32768]{0}', space=vmem, size = 0x8000, scoped, tag = 'output window, operand 0, single buffered']
    %8 = vsyncpa [#allocation4], 0
    %9 = vsyncpa [#allocation7], 0
    %10 = vsyncpa [#allocation5], 0
    // Predicated region
    $region2: #{tpu_custom_call.1} parent=1 // pred_check
      _
    $region3: #{tpu_custom_call.1} parent=1 // pred_check_branch
      %12 = sbr.rel (0) target = $region5
    $region4: #{tpu_custom_call.1} parent=1 // pred_region
      %14 = vsyncadd [#allocation4], 0
      %s15 = sshll.u32 %s0, 4
      %s16 = int_to_ptr.hbm [resolvable:$true] %s15
      %s17 = sshll.u32 [#allocation3], 4
      %s18 = int_to_ptr.vmem [resolvable:$true] %s17
      %23 = dma.hbm_to_vmem [thread:$0]  %s16, 1024, %s18, [#allocation4], 128, 128, 8
    $region5: #{tpu_custom_call.1} parent=1 // pred_fallthru
      _
    // Predicated region
    $region6: #{tpu_custom_call.1} parent=1 // pred_check
      _
    $region7: #{tpu_custom_call.1} parent=1 // pred_check_branch
      %25 = sbr.rel (0) target = $region9
    $region8: #{tpu_custom_call.1} parent=1 // pred_region
      %27 = vsyncadd [#allocation7], 0
      %s28 = sshll.u32 %s1, 4
      %s29 = int_to_ptr.hbm [resolvable:$true] %s28
      %s30 = sshll.u32 [#allocation6], 4
      %s31 = int_to_ptr.vmem [resolvable:$true] %s30
      %36 = dma.hbm_to_vmem [thread:$0]  %s29, 2048, %s31, [#allocation7], 64, 64, 4
    $region9: #{tpu_custom_call.1} parent=1 // pred_fallthru
      _
    // Predicated region
    $region10: #{tpu_custom_call.1} parent=1 // pred_check
      _
    $region11: #{tpu_custom_call.1} parent=1 // pred_check_branch
      %38 = sbr.rel (0) target = $region13
    $region12: #{tpu_custom_call.1} parent=1 // pred_region
      _
    $region13: #{tpu_custom_call.1} parent=1 // pred_fallthru
      _
    // Predicated region
    $region14: #{tpu_custom_call.1} parent=1 // pred_check
      _
    $region15: #{tpu_custom_call.1} parent=1 // pred_check_branch
      %40 = sbr.rel (0) target = $region17
    $region16: #{tpu_custom_call.1} parent=1 // pred_region
      %42 = dma.done [#allocation4], 1024
    $region17: #{tpu_custom_call.1} parent=1 // pred_fallthru
      _
    // Predicated region
    $region18: #{tpu_custom_call.1} parent=1 // pred_check
      _
    $region19: #{tpu_custom_call.1} parent=1 // pred_check_branch
      %44 = sbr.rel (0) target = $region21
    $region20: #{tpu_custom_call.1} parent=1 // pred_region
      %46 = dma.done [#allocation7], 2048
    $region21: #{tpu_custom_call.1} parent=1 // pred_fallthru
      _
    %p47 = scmp.eq.s32.totalorder 0, 0
    // Predicated region
    $region22: #{tpu_custom_call.1} parent=1 // pred_check
      %p48 = pneg %p47
    $region23: #{tpu_custom_call.1} parent=1 // pred_check_branch
      %50 = sbr.rel (%p48) target = $region25
    $region24: #{tpu_custom_call.1} parent=1 // pred_region
      %51 = vst [vmem:[#allocation2] sm:$0xff] 0.0
      %52 = vst [vmem:[#allocation2 + $0x8] sm:$0xff] 0.0
      %53 = vst [vmem:[#allocation2 + $0x10] sm:$0xff] 0.0
      %54 = vst [vmem:[#allocation2 + $0x18] sm:$0xff] 0.0
      %55 = vst [vmem:[#allocation2 + $0x20] sm:$0xff] 0.0
      %56 = vst [vmem:[#allocation2 + $0x28] sm:$0xff] 0.0
      %57 = vst [vmem:[#allocation2 + $0x30] sm:$0xff] 0.0
      %58 = vst [vmem:[#allocation2 + $0x38] sm:$0xff] 0.0
    $region25: #{tpu_custom_call.1} parent=1 // pred_fallthru
      _
    %v59 = vld [vmem:[#allocation2] sm:$0xff]
    %v60 = vld [vmem:[#allocation2 + $0x8] sm:$0xff]
    %v61 = vld [vmem:[#allocation2 + $0x10] sm:$0xff]
    %v62 = vld [vmem:[#allocation2 + $0x18] sm:$0xff]
    %v63 = vld [vmem:[#allocation2 + $0x20] sm:$0xff]
    %v64 = vld [vmem:[#allocation2 + $0x28] sm:$0xff]
    %v65 = vld [vmem:[#allocation2 + $0x30] sm:$0xff]
    %v66 = vld [vmem:[#allocation2 + $0x38] sm:$0xff]
    %v67 = vld [vmem:[#allocation3] sm:$0xff]
    %v68 = vld [vmem:[#allocation3 + $0x8] sm:$0xff]
    %v69 = vld [vmem:[#allocation3 + $0x10] sm:$0xff]
    %v70 = vld [vmem:[#allocation3 + $0x18] sm:$0xff]
    %v71 = vld [vmem:[#allocation3 + $0x20] sm:$0xff]
    %v72 = vld [vmem:[#allocation3 + $0x28] sm:$0xff]
    %v73 = vld [vmem:[#allocation3 + $0x30] sm:$0xff]
    %v74 = vld [vmem:[#allocation3 + $0x38] sm:$0xff]
    %v75 = vld [vmem:[#allocation6] sm:$0xf]
    %v76 = vld [vmem:[#allocation6 + $0x4] sm:$0xf]
    %v77 = vld [vmem:[#allocation6 + $0x8] sm:$0xf]
    %v78 = vld [vmem:[#allocation6 + $0xc] sm:$0xf]
    %v79 = vld [vmem:[#allocation6 + $0x10] sm:$0xf]
    %v80 = vld [vmem:[#allocation6 + $0x14] sm:$0xf]
    %v81 = vld [vmem:[#allocation6 + $0x18] sm:$0xf]
    %v82 = vld [vmem:[#allocation6 + $0x1c] sm:$0xf]
    %v83 = vld [vmem:[#allocation6 + $0x20] sm:$0xf]
    %v84 = vld [vmem:[#allocation6 + $0x24] sm:$0xf]
    %v85 = vld [vmem:[#allocation6 + $0x28] sm:$0xf]
    %v86 = vld [vmem:[#allocation6 + $0x2c] sm:$0xf]
    %v87 = vld [vmem:[#allocation6 + $0x30] sm:$0xf]
    %v88 = vld [vmem:[#allocation6 + $0x34] sm:$0xf]
    %v89 = vld [vmem:[#allocation6 + $0x38] sm:$0xf]
    %v90 = vld [vmem:[#allocation6 + $0x3c] sm:$0xf]
    %v91 = vld [vmem:[#allocation6 + $0x40] sm:$0xf]
    %v92 = vld [vmem:[#allocation6 + $0x44] sm:$0xf]
    %v93 = vld [vmem:[#allocation6 + $0x48] sm:$0xf]
    %v94 = vld [vmem:[#allocation6 + $0x4c] sm:$0xf]
    %v95 = vld [vmem:[#allocation6 + $0x50] sm:$0xf]
    %v96 = vld [vmem:[#allocation6 + $0x54] sm:$0xf]
    %v97 = vld [vmem:[#allocation6 + $0x58] sm:$0xf]
    %v98 = vld [vmem:[#allocation6 + $0x5c] sm:$0xf]
    %v99 = vld [vmem:[#allocation6 + $0x60] sm:$0xf]
    %v100 = vld [vmem:[#allocation6 + $0x64] sm:$0xf]
    %v101 = vld [vmem:[#allocation6 + $0x68] sm:$0xf]
    %v102 = vld [vmem:[#allocation6 + $0x6c] sm:$0xf]
    %v103 = vld [vmem:[#allocation6 + $0x70] sm:$0xf]
    %v104 = vld [vmem:[#allocation6 + $0x74] sm:$0xf]
    %v105 = vld [vmem:[#allocation6 + $0x78] sm:$0xf]
    %v106 = vld [vmem:[#allocation6 + $0x7c] sm:$0xf]
    %v115 = vunpack.c.l.b16 %v67
    %v116 = vunpack.c.h.b16 %v67
    %v117 = vunpack.c.l.b16 %v68
    %v118 = vunpack.c.h.b16 %v68
    %v119 = vunpack.c.l.b16 %v69
    %v120 = vunpack.c.h.b16 %v69
    %v121 = vunpack.c.l.b16 %v70
    %v122 = vunpack.c.h.b16 %v70
    %v123 = vunpack.c.l.b16 %v71
    %v124 = vunpack.c.h.b16 %v71
    %v125 = vunpack.c.l.b16 %v72
    %v126 = vunpack.c.h.b16 %v72
    %v127 = vunpack.c.l.b16 %v73
    %v128 = vunpack.c.h.b16 %v73
    %v129 = vunpack.c.l.b16 %v74
    %v130 = vunpack.c.h.b16 %v74
    %v131 = vpack.c.b16 %v117, %v115
    %v132 = vpack.c.b16 %v118, %v116
    %v133 = vpack.c.b16 %v121, %v119
    %v134 = vpack.c.b16 %v122, %v120
    %v135 = vpack.c.b16 %v125, %v123
    %v136 = vpack.c.b16 %v126, %v124
    %v137 = vpack.c.b16 %v129, %v127
    %v138 = vpack.c.b16 %v130, %v128
    %v179 = vunpack.c.l.b16 %v75
    %v180 = vunpack.c.l.b16 %v76
    %v181 = vunpack.c.l.b16 %v77
    %v182 = vunpack.c.l.b16 %v78
    %v183 = vunpack.c.l.b16 %v79
    %v184 = vunpack.c.l.b16 %v80
    %v185 = vunpack.c.l.b16 %v81
    %v186 = vunpack.c.l.b16 %v82
    %v187 = vunpack.c.l.b16 %v83
    %v188 = vunpack.c.l.b16 %v84
    %v189 = vunpack.c.l.b16 %v85
    %v190 = vunpack.c.l.b16 %v86
    %v191 = vunpack.c.l.b16 %v87
    %v192 = vunpack.c.l.b16 %v88
    %v193 = vunpack.c.l.b16 %v89
    %v194 = vunpack.c.l.b16 %v90
    %v195 = vunpack.c.l.b16 %v91
    %v196 = vunpack.c.l.b16 %v92
    %v197 = vunpack.c.l.b16 %v93
    %v198 = vunpack.c.l.b16 %v94
    %v199 = vunpack.c.l.b16 %v95
    %v200 = vunpack.c.l.b16 %v96
    %v201 = vunpack.c.l.b16 %v97
    %v202 = vunpack.c.l.b16 %v98
    %v203 = vunpack.c.l.b16 %v99
    %v204 = vunpack.c.l.b16 %v100
    %v205 = vunpack.c.l.b16 %v101
    %v206 = vunpack.c.l.b16 %v102
    %v207 = vunpack.c.l.b16 %v103
    %v208 = vunpack.c.l.b16 %v104
    %v209 = vunpack.c.l.b16 %v105
    %v210 = vunpack.c.l.b16 %v106
    %v211 = vpack.c.b16 %v180, %v179
    %v212 = vpack.c.b16 %v182, %v181
    %v213 = vpack.c.b16 %v184, %v183
    %v214 = vpack.c.b16 %v186, %v185
    %v215 = vpack.c.b16 %v188, %v187
    %v216 = vpack.c.b16 %v190, %v189
    %v217 = vpack.c.b16 %v192, %v191
    %v218 = vpack.c.b16 %v194, %v193
    %v219 = vpack.c.b16 %v196, %v195
    %v220 = vpack.c.b16 %v198, %v197
    %v221 = vpack.c.b16 %v200, %v199
    %v222 = vpack.c.b16 %v202, %v201
    %v223 = vpack.c.b16 %v204, %v203
    %v224 = vpack.c.b16 %v206, %v205
    %v225 = vpack.c.b16 %v208, %v207
    %v226 = vpack.c.b16 %v210, %v209
    %243 = vmatpush.bf16.msra.mxu0 %v218
    %244 = vmatpush.bf16.msra.mxu0 %v217
    %245 = vmatpush.bf16.msra.mxu0 %v216
    %246 = vmatpush.bf16.msra.mxu0 %v215
    %247 = vmatpush.bf16.msra.mxu0 %v214
    %248 = vmatpush.bf16.msra.mxu0 %v213
    %249 = vmatpush.bf16.msra.mxu0 %v212
    %250 = vmatpush.bf16.msra.mxu0 %v211
    %251 = vmatmul.bf16.gmra.mxu0 %v131
    %v252 = vpop.f32.mrf.mxu0
    %v253 = vadd.f32 0.0, %v252
    %v254 = vpop.f32.mrf.mxu0
    %v255 = vadd.f32 0.0, %v254
    %256 = vmatmul.bf16.gmra.mxu0 %v133
    %v257 = vpop.f32.mrf.mxu0
    %v258 = vadd.f32 0.0, %v257
    %v259 = vpop.f32.mrf.mxu0
    %v260 = vadd.f32 0.0, %v259
    %261 = vmatmul.bf16.gmra.mxu0 %v135
    %v262 = vpop.f32.mrf.mxu0
    %v263 = vadd.f32 0.0, %v262
    %v264 = vpop.f32.mrf.mxu0
    %v265 = vadd.f32 0.0, %v264
    %266 = vmatmul.bf16.gmra.mxu0 %v137
    %v267 = vpop.f32.mrf.mxu0
    %v268 = vadd.f32 0.0, %v267
    %v269 = vpop.f32.mrf.mxu0
    %v270 = vadd.f32 0.0, %v269
    %271 = vdwg.mxu0
    %272 = vmatpush.bf16.msra.mxu0 %v226
    %273 = vmatpush.bf16.msra.mxu0 %v225
    %274 = vmatpush.bf16.msra.mxu0 %v224
    %275 = vmatpush.bf16.msra.mxu0 %v223
    %276 = vmatpush.bf16.msra.mxu0 %v222
    %277 = vmatpush.bf16.msra.mxu0 %v221
    %278 = vmatpush.bf16.msra.mxu0 %v220
    %279 = vmatpush.bf16.msra.mxu0 %v219
    %280 = vmatmul.bf16.gmra.mxu0 %v132
    %v281 = vpop.f32.mrf.mxu0
    %v282 = vadd.f32 %v253, %v281
    %v283 = vpop.f32.mrf.mxu0
    %v284 = vadd.f32 %v255, %v283
    %285 = vmatmul.bf16.gmra.mxu0 %v134
    %v286 = vpop.f32.mrf.mxu0
    %v287 = vadd.f32 %v258, %v286
    %v288 = vpop.f32.mrf.mxu0
    %v289 = vadd.f32 %v260, %v288
    %290 = vmatmul.bf16.gmra.mxu0 %v136
    %v291 = vpop.f32.mrf.mxu0
    %v292 = vadd.f32 %v263, %v291
    %v293 = vpop.f32.mrf.mxu0
    %v294 = vadd.f32 %v265, %v293
    %295 = vmatmul.bf16.gmra.mxu0 %v138
    %v296 = vpop.f32.mrf.mxu0
    %v297 = vadd.f32 %v268, %v296
    %v298 = vpop.f32.mrf.mxu0
    %v299 = vadd.f32 %v270, %v298
    %300 = vdwg.mxu0
    %v301 = vadd.f32 %v59, %v282
    %v302 = vadd.f32 %v60, %v284
    %v303 = vadd.f32 %v61, %v287
    %v304 = vadd.f32 %v62, %v289
    %v305 = vadd.f32 %v63, %v292
    %v306 = vadd.f32 %v64, %v294
    %v307 = vadd.f32 %v65, %v297
    %v308 = vadd.f32 %v66, %v299
    %309 = vst [vmem:[#allocation2] sm:$0xff] %v301
    %310 = vst [vmem:[#allocation2 + $0x8] sm:$0xff] %v302
    %311 = vst [vmem:[#allocation2 + $0x10] sm:$0xff] %v303
    %312 = vst [vmem:[#allocation2 + $0x18] sm:$0xff] %v304
    %313 = vst [vmem:[#allocation2 + $0x20] sm:$0xff] %v305
    %314 = vst [vmem:[#allocation2 + $0x28] sm:$0xff] %v306
    %315 = vst [vmem:[#allocation2 + $0x30] sm:$0xff] %v307
    %316 = vst [vmem:[#allocation2 + $0x38] sm:$0xff] %v308
    // Predicated region
    $region26: #{tpu_custom_call.1} parent=1 // pred_check
      %p317 = pneg %p47
    $region27: #{tpu_custom_call.1} parent=1 // pred_check_branch
      %319 = sbr.rel (%p317) target = $region29
    $region28: #{tpu_custom_call.1} parent=1 // pred_region
      %v320 = vld [vmem:[#allocation2] sm:$0xff]
      %v321 = vld [vmem:[#allocation2 + $0x8] sm:$0xff]
      %v322 = vld [vmem:[#allocation2 + $0x10] sm:$0xff]
      %v323 = vld [vmem:[#allocation2 + $0x18] sm:$0xff]
      %v324 = vld [vmem:[#allocation2 + $0x20] sm:$0xff]
      %v325 = vld [vmem:[#allocation2 + $0x28] sm:$0xff]
      %v326 = vld [vmem:[#allocation2 + $0x30] sm:$0xff]
      %v327 = vld [vmem:[#allocation2 + $0x38] sm:$0xff]
      %v328 = vld [vmem:[%s2] sm:$0x1]
      %v330 = vperm.slane %v328, 0
      %v332 = vadd.f32 %v320, %v330
      %v333 = vadd.f32 %v321, %v330
      %v334 = vadd.f32 %v322, %v330
      %v335 = vadd.f32 %v323, %v330
      %v336 = vadd.f32 %v324, %v330
      %v337 = vadd.f32 %v325, %v330
      %v338 = vadd.f32 %v326, %v330
      %v339 = vadd.f32 %v327, %v330
      %340 = vst [vmem:[#allocation8] sm:$0xff] %v332
      %341 = vst [vmem:[#allocation8 + $0x8] sm:$0xff] %v333
      %342 = vst [vmem:[#allocation8 + $0x10] sm:$0xff] %v334
      %343 = vst [vmem:[#allocation8 + $0x18] sm:$0xff] %v335
      %344 = vst [vmem:[#allocation8 + $0x20] sm:$0xff] %v336
      %345 = vst [vmem:[#allocation8 + $0x28] sm:$0xff] %v337
      %346 = vst [vmem:[#allocation8 + $0x30] sm:$0xff] %v338
      %347 = vst [vmem:[#allocation8 + $0x38] sm:$0xff] %v339
    $region29: #{tpu_custom_call.1} parent=1 // pred_fallthru
      _
    // Predicated region
    $region30: #{tpu_custom_call.1} parent=1 // pred_check
      _
    $region31: #{tpu_custom_call.1} parent=1 // pred_check_branch
      %349 = sbr.rel (0) target = $region33
    $region32: #{tpu_custom_call.1} parent=1 // pred_region
      %351 = vsyncadd [#allocation5], 0
      %s352 = sshll.u32 [#allocation8], 4
      %s353 = int_to_ptr.vmem [resolvable:$true] %s352
      %s354 = sshll.u32 %s3, 4
      %s355 = int_to_ptr.hbm [resolvable:$true] %s354
      %360 = dma.vmem_to_hbm [thread:$0]  %s353, 1024, %s355, [#allocation5], 128, 128, 8
    $region33: #{tpu_custom_call.1} parent=1 // pred_fallthru
      _
    // Predicated region
    $region34: #{tpu_custom_call.1} parent=1 // pred_check
      _
    $region35: #{tpu_custom_call.1} parent=1 // pred_check_branch
      %362 = sbr.rel (0) target = $region37
    $region36: #{tpu_custom_call.1} parent=1 // pred_region
      %364 = dma.done [#allocation5], 1024
    $region37: #{tpu_custom_call.1} parent=1 // pred_fallthru
      _
    %365 = vsyncpa [#allocation4], 1
    %366 = vsyncpa [#allocation7], 1
    %367 = vsyncpa [#allocation5], 1

</llo_original>
